<compile_context>
chip_gen: v7x
topology: tpu7x:2x2x1
jax: 0.10.0
libtpu: 0.0.40
codegen_flags: <defaults>
</compile_context>

<pallas_src>
import functools

import numpy as np
import jax
import jax.numpy as jnp
from jax import lax
from jax.experimental import pallas as pl
from jax.experimental.pallas import tpu as pltpu


def _round_up(x, m):
  return (x + m - 1) // m * m


# ----------------------------------------------------------------------------
# Pallas kernel: whole-tree RecurCell evaluation, grid over dependency waves
# ----------------------------------------------------------------------------
def recur_tree_kernel(lidx_ref, ridx_ref,                 # SMEM schedule (prefetched)
                      leaf_ref, w_ref, b_ref, wg_ref, bg_ref,  # VMEM inputs (resident)
                      table_ref, prob_ref,                # outputs (table resident)
                      lbuf, rbuf,                         # VMEM scratch
                      *, emb_size, max_nodes, int_base):
  wave = pl.program_id(0)

  # Wave 0: seed the resident node-embedding table with the leaf embeddings.
  @pl.when(wave == 0)
  def _():
    table_ref[...] = leaf_ref[...]

  # Gather this wave's children rows (dynamic sublane-row reads).
  # Padded slots read row 0 (a leaf) -> harmless garbage, confined below.
  for s in range(max_nodes):
    lbuf[pl.ds(s, 1), :] = table_ref[pl.ds(lidx_ref[wave, s], 1), :]
    rbuf[pl.ds(s, 1), :] = table_ref[pl.ds(ridx_ref[wave, s], 1), :]

  # RecurCell: W split statically so [left | right] never has to be built.
  wl = w_ref[:emb_size, :]
  wr = w_ref[emb_size:, :]
  node = jnp.tanh(
      jnp.dot(lbuf[...], wl, preferred_element_type=jnp.float32)
      + jnp.dot(rbuf[...], wr, preferred_element_type=jnp.float32)
      + b_ref[...])

  # Write this wave's node embeddings into its reserved, 8-aligned table block.
  # Padded slots only touch their own reserved rows (never read later).
  row0 = pl.multiple_of(int_base + wave * max_nodes, 8)
  table_ref[pl.ds(row0, max_nodes), :] = node

  # Lane-dense op logits (O padded to 128): one unmasked per-wave output block.
  prob_ref[...] = (jnp.dot(node, wg_ref[...], preferred_element_type=jnp.float32)
                   + bg_ref[...])


@functools.lru_cache(maxsize=None)
def make_tree_forward(emb_size, op_size, max_nodes, num_waves,
                      n_table_rows, int_base):
  """Builds the single-launch forward (pallas_call + tiny jitted glue)."""
  o_pad = _round_up(op_size, 128)
  kernel = functools.partial(recur_tree_kernel, emb_size=emb_size,
                             max_nodes=max_nodes, int_base=int_base)
  const = lambda w, *_: (0, 0)          # resident block: DMA'd once
  grid_spec = pltpu.PrefetchScalarGridSpec(
      num_scalar_prefetch=2,            # lidx, ridx  -> SMEM
      grid=(num_waves,),
      in_specs=[
          pl.BlockSpec((n_table_rows, emb_size), const),   # leaf table
          pl.BlockSpec((2 * emb_size, emb_size), const),   # W  (2E, E)
          pl.BlockSpec((1, emb_size), const),              # b
          pl.BlockSpec((emb_size, o_pad), const),          # Wg (lane-padded)
          pl.BlockSpec((1, o_pad), const),                 # bg (lane-padded)
      ],
      out_specs=(
          pl.BlockSpec((n_table_rows, emb_size), const),          # node table
          pl.BlockSpec((max_nodes, o_pad), lambda w, *_: (w, 0)),  # op logits
      ),
      scratch_shapes=[
          pltpu.VMEM((max_nodes, emb_size), jnp.float32),   # gathered L rows
          pltpu.VMEM((max_nodes, emb_size), jnp.float32),   # gathered R rows
      ],
  )
  call = pl.pallas_call(
      kernel,
      grid_spec=grid_spec,
      out_shape=(
          jax.ShapeDtypeStruct((n_table_rows, emb_size), jnp.float32),
          jax.ShapeDtypeStruct((num_waves * max_nodes, o_pad), jnp.float32),
      ),
      compiler_params=pltpu.CompilerParams(
          dimension_semantics=("arbitrary",)),   # waves are dependent
  )

  @jax.jit
  def forward(lidx, ridx, perm_rows, leaf_idx, num_embedding,
              w, b, wg_pad, bg_pad):
    leaf_rows = jnp.take(num_embedding, leaf_idx, axis=0)
    leaf_table = jnp.zeros((n_table_rows, emb_size), jnp.float32)
    leaf_table = leaf_table.at[:leaf_rows.shape[0], :].set(leaf_rows)
    table, prob_all = call(lidx, ridx, leaf_table, w, b, wg_pad, bg_pad)
    # reorder wave-slot rows into post-order (module order), drop lane padding
    node_prob = jnp.take(prob_all, perm_rows, axis=0)[:, :op_size]
    return table, node_prob

  return forward


# ----------------------------------------------------------------------------
# Host-side tree plumbing (pure Python / numpy; no per-node device ops)
# ----------------------------------------------------------------------------
class TreeNode:
  def __init__(self, value, left=None, right=None):
    self.node_value = value
    self.left_node = left
    self.right_node = right
    self.is_leaf = left is None and right is None
    self.embedding = None


def build_plan(root, look_up, op_list, max_nodes):
  assert max_nodes % 8 == 0
  leaves, internals = [], []

  def post(n):
    if n.is_leaf:
      leaves.append(n)
    else:
      post(n.left_node)
      post(n.right_node)
      internals.append(n)
  post(root)

  n_leaves, n_internal = len(leaves), len(internals)
  int_base = _round_up(max(n_leaves, 1), 8)

  row = {id(n): i for i, n in enumerate(leaves)}           # leaf table rows
  leaf_idx = np.array(
      [look_up.index(n.node_value) if n.node_value in look_up else 0
       for n in leaves], np.int32)

  # TODO(synk): the data-dependent tree recursion cannot live inside a Pallas
  # kernel; it is compiled host-side into this static wave schedule.
  memo = {}
  def height(n):
    if n.is_leaf:
      return 0
    k = id(n)
    if k not in memo:
      memo[k] = 1 + max(height(n.left_node), height(n.right_node))
    return memo[k]

  hs = {id(n): height(n) for n in internals}
  waves = []
  for h in sorted(set(hs.values())):
    grp = [n for n in internals if hs[id(n)] == h]
    for s in range(0, len(grp), max_nodes):
      waves.append(grp[s:s + max_nodes])
  num_waves = len(waves)

  slot_of = {}
  for wi, wave in enumerate(waves):
    for s, n in enumerate(wave):
      row[id(n)] = int_base + wi * max_nodes + s
      slot_of[id(n)] = wi * max_nodes + s
  n_table_rows = int_base + max(num_waves, 1) * max_nodes

  lidx = np.zeros((max(num_waves, 1), max_nodes), np.int32)
  ridx = np.zeros((max(num_waves, 1), max_nodes), np.int32)
  for wi, wave in enumerate(waves):
    for s, n in enumerate(wave):
      lidx[wi, s] = row[id(n.left_node)]
      ridx[wi, s] = row[id(n.right_node)]

  perm_rows = np.array([slot_of[id(n)] for n in internals], np.int32)
  labels = np.array([op_list.index(n.node_value) for n in internals], np.int32)

  return dict(leaves=leaves, internals=internals, row=row,
              n_leaves=n_leaves, n_internal=n_internal, int_base=int_base,
              n_table_rows=n_table_rows, num_waves=num_waves,
              lidx=lidx, ridx=ridx, perm_rows=perm_rows,
              leaf_idx=leaf_idx, labels=labels)


def recursive_nn_forward(params, root, num_embedding, look_up, op_list,
                         max_nodes=8):
  """Replica of RecursiveNN.forward; returns (nodeProb [N_int,O], label)."""
  plan = build_plan(root, look_up, op_list, max_nodes)
  if plan["n_internal"] == 0:                      # single-leaf expression
    emb_np = np.asarray(num_embedding)
    root.embedding = emb_np[int(plan["leaf_idx"][0])]
    return [], []

  emb_size = num_embedding.shape[1]
  fwd = make_tree_forward(emb_size, len(op_list), max_nodes,
                          plan["num_waves"], plan["n_table_rows"],
                          plan["int_base"])
  table, node_prob = fwd(plan["lidx"], plan["ridx"], plan["perm_rows"],
                         plan["leaf_idx"], num_embedding,
                         params["w"], params["b"],
                         params["wg_pad"], params["bg_pad"])

  # Side-effect fidelity with the PyTorch module (node.embedding), done with
  # one device->host copy and cheap numpy row views (no per-node device ops).
  table_np = np.asarray(table)
  for n in plan["leaves"] + plan["internals"]:
    n.embedding = table_np[plan["row"][id(n)]]

  return node_prob, jnp.asarray(plan["labels"])


# ----------------------------------------------------------------------------
# Pure-JAX reference (mirrors the PyTorch traverse exactly) for verification
# ----------------------------------------------------------------------------
def reference_forward(params, root, num_embedding, look_up, op_list):
  hp = lax.Precision.HIGHEST
  probs, labels = [], []

  def trav(node):
    if node.is_leaf:
      s = node.node_value
      emb = (num_embedding[look_up.index(s)] if s in look_up
             else num_embedding[0])
      return emb[None, :]
    lv = trav(node.left_node)
    rv = trav(node.right_node)
    comb = jnp.concatenate([lv, rv], axis=1)
    node_emb = jnp.tanh(jnp.dot(comb, params["w"], precision=hp) + params["b"])
    op = jnp.dot(node_emb, params["wg"], precision=hp) + params["bg"]
    probs.append(op)
    labels.append(op_list.index(node.node_value))
    return node_emb

  trav(root)
  return jnp.concatenate(probs, axis=0), jnp.array(labels, dtype=jnp.int32)


# ----------------------------------------------------------------------------
if __name__ == "__main__":
  E = 32            # emb_size
  O = 5             # op_size
  MAX_NODES = 8     # wave width (multiple of 8); use 128 when batching trees
  O_PAD = _round_up(O, 128)
  op_list = ["+", "-", "*", "/", "^"]
  look_up = ["N0", "N1", "N2", "N3", "N4"]

  key = jax.random.PRNGKey(0)
  k1, k2, k3, k4, k5 = jax.random.split(key, 5)
  params = {
      "w":  (0.1 * jax.random.normal(k1, (2 * E, E))).astype(jnp.float32),
      "b":  (0.1 * jax.random.normal(k2, (1, E))).astype(jnp.float32),
      "wg": (0.1 * jax.random.normal(k3, (E, O))).astype(jnp.float32),
      "bg": (0.1 * jax.random.normal(k4, (1, O))).astype(jnp.float32),
  }
  # lane-dense (128-wide) copies of the generate_linear weight / bias
  params["wg_pad"] = jnp.zeros((E, O_PAD), jnp.float32).at[:, :O].set(params["wg"])
  params["bg_pad"] = jnp.zeros((1, O_PAD), jnp.float32).at[:, :O].set(params["bg"])

  num_embedding = (0.1 * jax.random.normal(k5, (len(look_up), E))
                   ).astype(jnp.float32)

  # Expression tree: ((N0 + N1) * (N2 - N3)) + (N4 / x)   ("x" not in look_up)
  n0, n1, n2, n3, n4 = (TreeNode(s) for s in ["N0", "N1", "N2", "N3", "N4"])
  nx = TreeNode("x")
  add1 = TreeNode("+", n0, n1)
  sub1 = TreeNode("-", n2, n3)
  div1 = TreeNode("/", n4, nx)
  mul1 = TreeNode("*", add1, sub1)
  root = TreeNode("+", mul1, div1)

  node_prob, labels = recursive_nn_forward(
      params, root, num_embedding, look_up, op_list, MAX_NODES)
  node_prob, labels = jax.block_until_ready((node_prob, labels))

  ref_prob, ref_labels = reference_forward(
      params, root, num_embedding, look_up, op_list)

  np.testing.assert_allclose(np.asarray(node_prob), np.asarray(ref_prob),
                             rtol=1e-4, atol=1e-4)
  assert list(np.asarray(labels)) == list(np.asarray(ref_labels))
  assert node_prob.shape == (5, O)      # 5 internal nodes in the tree
  assert labels.shape == (5,)
  print("KERNEL_OK")
</pallas_src>

<mosaic_0001>
module attributes {stable_mosaic.version = 11 : i64} {
  func.func @recur_tree_kernel(%arg0: i32, %arg1: memref<3x8xi32, #tpu.memory_space<smem>>, %arg2: memref<3x8xi32, #tpu.memory_space<smem>>, %arg3: memref<32x32xf32, #tpu.memory_space<vmem>>, %arg4: memref<64x32xf32, #tpu.memory_space<vmem>>, %arg5: memref<1x32xf32, #tpu.memory_space<vmem>>, %arg6: memref<32x128xf32, #tpu.memory_space<vmem>>, %arg7: memref<1x128xf32, #tpu.memory_space<vmem>>, %arg8: memref<32x32xf32, #tpu.memory_space<vmem>>, %arg9: memref<8x128xf32, #tpu.memory_space<vmem>>, %arg10: memref<8x32xf32, #tpu.memory_space<vmem>>, %arg11: memref<8x32xf32, #tpu.memory_space<vmem>>) attributes {dimension_semantics = [#tpu.dimension_semantics<arbitrary>], iteration_bounds = array<i64: 3>, scalar_prefetch = 2 : i64, scratch_operands = 2 : i64, tpu.core_type = #tpu.core_type<tc>, window_params = [{pipeline_mode = #tpu.pipeline_mode<synchronous>, transform_indices = @transform_0, window_bounds = array<i64: 32, 32>}, {pipeline_mode = #tpu.pipeline_mode<synchronous>, transform_indices = @transform_1, window_bounds = array<i64: 64, 32>}, {pipeline_mode = #tpu.pipeline_mode<synchronous>, transform_indices = @transform_2, window_bounds = array<i64: 1, 32>}, {pipeline_mode = #tpu.pipeline_mode<synchronous>, transform_indices = @transform_3, window_bounds = array<i64: 32, 128>}, {pipeline_mode = #tpu.pipeline_mode<synchronous>, transform_indices = @transform_4, window_bounds = array<i64: 1, 128>}, {pipeline_mode = #tpu.pipeline_mode<synchronous>, transform_indices = @transform_5, window_bounds = array<i64: 32, 32>}, {transform_indices = @transform_6, window_bounds = array<i64: 8, 128>}]} {
    %c0_i32 = arith.constant 0 : i32
    %0 = arith.cmpi eq, %arg0, %c0_i32 : i32
    %1 = arith.extui %0 : i1 to i32
    %c0_i32_0 = arith.constant 0 : i32
    %2 = arith.cmpi ne, %1, %c0_i32_0 : i32
    scf.if %2 {
      %c0_76 = arith.constant 0 : index
      %c0_77 = arith.constant 0 : index
      %105 = vector.load %arg3[%c0_76, %c0_77] : memref<32x32xf32, #tpu.memory_space<vmem>>, vector<32x32xf32>
      %c0_78 = arith.constant 0 : index
      %c0_79 = arith.constant 0 : index
      %106 = vector.load %arg8[%c0_78, %c0_79] : memref<32x32xf32, #tpu.memory_space<vmem>>, vector<32x32xf32>
      tpu.vector_store %arg8[%c0_78, %c0_79], %105 {strides = array<i32>} : memref<32x32xf32, #tpu.memory_space<vmem>>, vector<32x32xf32>,
    } else {
    }
    %3 = arith.index_cast %arg0 : i32 to index
    %c0 = arith.constant 0 : index
    %4 = memref.load %arg1[%3, %c0] : memref<3x8xi32, #tpu.memory_space<smem>>
    %5 = arith.index_cast %4 : i32 to index
    %c0_1 = arith.constant 0 : index
    %6 = vector.load %arg8[%5, %c0_1] : memref<32x32xf32, #tpu.memory_space<vmem>>, vector<1x32xf32>
    %c0_2 = arith.constant 0 : index
    %c0_3 = arith.constant 0 : index
    %7 = vector.load %arg10[%c0_2, %c0_3] : memref<8x32xf32, #tpu.memory_space<vmem>>, vector<1x32xf32>
    tpu.vector_store %arg10[%c0_2, %c0_3], %6 {strides = array<i32>} : memref<8x32xf32, #tpu.memory_space<vmem>>, vector<1x32xf32>,
    %8 = arith.index_cast %arg0 : i32 to index
    %c0_4 = arith.constant 0 : index
    %9 = memref.load %arg2[%8, %c0_4] : memref<3x8xi32, #tpu.memory_space<smem>>
    %10 = arith.index_cast %9 : i32 to index
    %c0_5 = arith.constant 0 : index
    %11 = vector.load %arg8[%10, %c0_5] : memref<32x32xf32, #tpu.memory_space<vmem>>, vector<1x32xf32>
    %c0_6 = arith.constant 0 : index
    %c0_7 = arith.constant 0 : index
    %12 = vector.load %arg11[%c0_6, %c0_7] : memref<8x32xf32, #tpu.memory_space<vmem>>, vector<1x32xf32>
    tpu.vector_store %arg11[%c0_6, %c0_7], %11 {strides = array<i32>} : memref<8x32xf32, #tpu.memory_space<vmem>>, vector<1x32xf32>,
    %13 = arith.index_cast %arg0 : i32 to index
    %c1 = arith.constant 1 : index
    %14 = memref.load %arg1[%13, %c1] : memref<3x8xi32, #tpu.memory_space<smem>>
    %15 = arith.index_cast %14 : i32 to index
    %c0_8 = arith.constant 0 : index
    %16 = vector.load %arg8[%15, %c0_8] : memref<32x32xf32, #tpu.memory_space<vmem>>, vector<1x32xf32>
    %c1_9 = arith.constant 1 : index
    %c0_10 = arith.constant 0 : index
    %17 = vector.load %arg10[%c1_9, %c0_10] : memref<8x32xf32, #tpu.memory_space<vmem>>, vector<1x32xf32>
    tpu.vector_store %arg10[%c1_9, %c0_10], %16 {strides = array<i32>} : memref<8x32xf32, #tpu.memory_space<vmem>>, vector<1x32xf32>,
    %18 = arith.index_cast %arg0 : i32 to index
    %c1_11 = arith.constant 1 : index
    %19 = memref.load %arg2[%18, %c1_11] : memref<3x8xi32, #tpu.memory_space<smem>>
    %20 = arith.index_cast %19 : i32 to index
    %c0_12 = arith.constant 0 : index
    %21 = vector.load %arg8[%20, %c0_12] : memref<32x32xf32, #tpu.memory_space<vmem>>, vector<1x32xf32>
    %c1_13 = arith.constant 1 : index
    %c0_14 = arith.constant 0 : index
    %22 = vector.load %arg11[%c1_13, %c0_14] : memref<8x32xf32, #tpu.memory_space<vmem>>, vector<1x32xf32>
    tpu.vector_store %arg11[%c1_13, %c0_14], %21 {strides = array<i32>} : memref<8x32xf32, #tpu.memory_space<vmem>>, vector<1x32xf32>,
    %23 = arith.index_cast %arg0 : i32 to index
    %c2 = arith.constant 2 : index
    %24 = memref.load %arg1[%23, %c2] : memref<3x8xi32, #tpu.memory_space<smem>>
    %25 = arith.index_cast %24 : i32 to index
    %c0_15 = arith.constant 0 : index
    %26 = vector.load %arg8[%25, %c0_15] : memref<32x32xf32, #tpu.memory_space<vmem>>, vector<1x32xf32>
    %c2_16 = arith.constant 2 : index
    %c0_17 = arith.constant 0 : index
    %27 = vector.load %arg10[%c2_16, %c0_17] : memref<8x32xf32, #tpu.memory_space<vmem>>, vector<1x32xf32>
    tpu.vector_store %arg10[%c2_16, %c0_17], %26 {strides = array<i32>} : memref<8x32xf32, #tpu.memory_space<vmem>>, vector<1x32xf32>,
    %28 = arith.index_cast %arg0 : i32 to index
    %c2_18 = arith.constant 2 : index
    %29 = memref.load %arg2[%28, %c2_18] : memref<3x8xi32, #tpu.memory_space<smem>>
    %30 = arith.index_cast %29 : i32 to index
    %c0_19 = arith.constant 0 : index
    %31 = vector.load %arg8[%30, %c0_19] : memref<32x32xf32, #tpu.memory_space<vmem>>, vector<1x32xf32>
    %c2_20 = arith.constant 2 : index
    %c0_21 = arith.constant 0 : index
    %32 = vector.load %arg11[%c2_20, %c0_21] : memref<8x32xf32, #tpu.memory_space<vmem>>, vector<1x32xf32>
    tpu.vector_store %arg11[%c2_20, %c0_21], %31 {strides = array<i32>} : memref<8x32xf32, #tpu.memory_space<vmem>>, vector<1x32xf32>,
    %33 = arith.index_cast %arg0 : i32 to index
    %c3 = arith.constant 3 : index
    %34 = memref.load %arg1[%33, %c3] : memref<3x8xi32, #tpu.memory_space<smem>>
    %35 = arith.index_cast %34 : i32 to index
    %c0_22 = arith.constant 0 : index
    %36 = vector.load %arg8[%35, %c0_22] : memref<32x32xf32, #tpu.memory_space<vmem>>, vector<1x32xf32>
    %c3_23 = arith.constant 3 : index
    %c0_24 = arith.constant 0 : index
    %37 = vector.load %arg10[%c3_23, %c0_24] : memref<8x32xf32, #tpu.memory_space<vmem>>, vector<1x32xf32>
    tpu.vector_store %arg10[%c3_23, %c0_24], %36 {strides = array<i32>} : memref<8x32xf32, #tpu.memory_space<vmem>>, vector<1x32xf32>,
    %38 = arith.index_cast %arg0 : i32 to index
    %c3_25 = arith.constant 3 : index
    %39 = memref.load %arg2[%38, %c3_25] : memref<3x8xi32, #tpu.memory_space<smem>>
    %40 = arith.index_cast %39 : i32 to index
    %c0_26 = arith.constant 0 : index
    %41 = vector.load %arg8[%40, %c0_26] : memref<32x32xf32, #tpu.memory_space<vmem>>, vector<1x32xf32>
    %c3_27 = arith.constant 3 : index
    %c0_28 = arith.constant 0 : index
    %42 = vector.load %arg11[%c3_27, %c0_28] : memref<8x32xf32, #tpu.memory_space<vmem>>, vector<1x32xf32>
    tpu.vector_store %arg11[%c3_27, %c0_28], %41 {strides = array<i32>} : memref<8x32xf32, #tpu.memory_space<vmem>>, vector<1x32xf32>,
    %43 = arith.index_cast %arg0 : i32 to index
    %c4 = arith.constant 4 : index
    %44 = memref.load %arg1[%43, %c4] : memref<3x8xi32, #tpu.memory_space<smem>>
    %45 = arith.index_cast %44 : i32 to index
    %c0_29 = arith.constant 0 : index
    %46 = vector.load %arg8[%45, %c0_29] : memref<32x32xf32, #tpu.memory_space<vmem>>, vector<1x32xf32>
    %c4_30 = arith.constant 4 : index
    %c0_31 = arith.constant 0 : index
    %47 = vector.load %arg10[%c4_30, %c0_31] : memref<8x32xf32, #tpu.memory_space<vmem>>, vector<1x32xf32>
    tpu.vector_store %arg10[%c4_30, %c0_31], %46 {strides = array<i32>} : memref<8x32xf32, #tpu.memory_space<vmem>>, vector<1x32xf32>,
    %48 = arith.index_cast %arg0 : i32 to index
    %c4_32 = arith.constant 4 : index
    %49 = memref.load %arg2[%48, %c4_32] : memref<3x8xi32, #tpu.memory_space<smem>>
    %50 = arith.index_cast %49 : i32 to index
    %c0_33 = arith.constant 0 : index
    %51 = vector.load %arg8[%50, %c0_33] : memref<32x32xf32, #tpu.memory_space<vmem>>, vector<1x32xf32>
    %c4_34 = arith.constant 4 : index
    %c0_35 = arith.constant 0 : index
    %52 = vector.load %arg11[%c4_34, %c0_35] : memref<8x32xf32, #tpu.memory_space<vmem>>, vector<1x32xf32>
    tpu.vector_store %arg11[%c4_34, %c0_35], %51 {strides = array<i32>} : memref<8x32xf32, #tpu.memory_space<vmem>>, vector<1x32xf32>,
    %53 = arith.index_cast %arg0 : i32 to index
    %c5 = arith.constant 5 : index
    %54 = memref.load %arg1[%53, %c5] : memref<3x8xi32, #tpu.memory_space<smem>>
    %55 = arith.index_cast %54 : i32 to index
    %c0_36 = arith.constant 0 : index
    %56 = vector.load %arg8[%55, %c0_36] : memref<32x32xf32, #tpu.memory_space<vmem>>, vector<1x32xf32>
    %c5_37 = arith.constant 5 : index
    %c0_38 = arith.constant 0 : index
    %57 = vector.load %arg10[%c5_37, %c0_38] : memref<8x32xf32, #tpu.memory_space<vmem>>, vector<1x32xf32>
    tpu.vector_store %arg10[%c5_37, %c0_38], %56 {strides = array<i32>} : memref<8x32xf32, #tpu.memory_space<vmem>>, vector<1x32xf32>,
    %58 = arith.index_cast %arg0 : i32 to index
    %c5_39 = arith.constant 5 : index
    %59 = memref.load %arg2[%58, %c5_39] : memref<3x8xi32, #tpu.memory_space<smem>>
    %60 = arith.index_cast %59 : i32 to index
    %c0_40 = arith.constant 0 : index
    %61 = vector.load %arg8[%60, %c0_40] : memref<32x32xf32, #tpu.memory_space<vmem>>, vector<1x32xf32>
    %c5_41 = arith.constant 5 : index
    %c0_42 = arith.constant 0 : index
    %62 = vector.load %arg11[%c5_41, %c0_42] : memref<8x32xf32, #tpu.memory_space<vmem>>, vector<1x32xf32>
    tpu.vector_store %arg11[%c5_41, %c0_42], %61 {strides = array<i32>} : memref<8x32xf32, #tpu.memory_space<vmem>>, vector<1x32xf32>,
    %63 = arith.index_cast %arg0 : i32 to index
    %c6 = arith.constant 6 : index
    %64 = memref.load %arg1[%63, %c6] : memref<3x8xi32, #tpu.memory_space<smem>>
    %65 = arith.index_cast %64 : i32 to index
    %c0_43 = arith.constant 0 : index
    %66 = vector.load %arg8[%65, %c0_43] : memref<32x32xf32, #tpu.memory_space<vmem>>, vector<1x32xf32>
    %c6_44 = arith.constant 6 : index
    %c0_45 = arith.constant 0 : index
    %67 = vector.load %arg10[%c6_44, %c0_45] : memref<8x32xf32, #tpu.memory_space<vmem>>, vector<1x32xf32>
    tpu.vector_store %arg10[%c6_44, %c0_45], %66 {strides = array<i32>} : memref<8x32xf32, #tpu.memory_space<vmem>>, vector<1x32xf32>,
    %68 = arith.index_cast %arg0 : i32 to index
    %c6_46 = arith.constant 6 : index
    %69 = memref.load %arg2[%68, %c6_46] : memref<3x8xi32, #tpu.memory_space<smem>>
    %70 = arith.index_cast %69 : i32 to index
    %c0_47 = arith.constant 0 : index
    %71 = vector.load %arg8[%70, %c0_47] : memref<32x32xf32, #tpu.memory_space<vmem>>, vector<1x32xf32>
    %c6_48 = arith.constant 6 : index
    %c0_49 = arith.constant 0 : index
    %72 = vector.load %arg11[%c6_48, %c0_49] : memref<8x32xf32, #tpu.memory_space<vmem>>, vector<1x32xf32>
    tpu.vector_store %arg11[%c6_48, %c0_49], %71 {strides = array<i32>} : memref<8x32xf32, #tpu.memory_space<vmem>>, vector<1x32xf32>,
    %73 = arith.index_cast %arg0 : i32 to index
    %c7 = arith.constant 7 : index
    %74 = memref.load %arg1[%73, %c7] : memref<3x8xi32, #tpu.memory_space<smem>>
    %75 = arith.index_cast %74 : i32 to index
    %c0_50 = arith.constant 0 : index
    %76 = vector.load %arg8[%75, %c0_50] : memref<32x32xf32, #tpu.memory_space<vmem>>, vector<1x32xf32>
    %c7_51 = arith.constant 7 : index
    %c0_52 = arith.constant 0 : index
    %77 = vector.load %arg10[%c7_51, %c0_52] : memref<8x32xf32, #tpu.memory_space<vmem>>, vector<1x32xf32>
    tpu.vector_store %arg10[%c7_51, %c0_52], %76 {strides = array<i32>} : memref<8x32xf32, #tpu.memory_space<vmem>>, vector<1x32xf32>,
    %78 = arith.index_cast %arg0 : i32 to index
    %c7_53 = arith.constant 7 : index
    %79 = memref.load %arg2[%78, %c7_53] : memref<3x8xi32, #tpu.memory_space<smem>>
    %80 = arith.index_cast %79 : i32 to index
    %c0_54 = arith.constant 0 : index
    %81 = vector.load %arg8[%80, %c0_54] : memref<32x32xf32, #tpu.memory_space<vmem>>, vector<1x32xf32>
    %c7_55 = arith.constant 7 : index
    %c0_56 = arith.constant 0 : index
    %82 = vector.load %arg11[%c7_55, %c0_56] : memref<8x32xf32, #tpu.memory_space<vmem>>, vector<1x32xf32>
    tpu.vector_store %arg11[%c7_55, %c0_56], %81 {strides = array<i32>} : memref<8x32xf32, #tpu.memory_space<vmem>>, vector<1x32xf32>,
    %c0_57 = arith.constant 0 : index
    %c0_58 = arith.constant 0 : index
    %83 = vector.load %arg4[%c0_57, %c0_58] : memref<64x32xf32, #tpu.memory_space<vmem>>, vector<32x32xf32>
    %c32 = arith.constant 32 : index
    %c0_59 = arith.constant 0 : index
    %84 = vector.load %arg4[%c32, %c0_59] : memref<64x32xf32, #tpu.memory_space<vmem>>, vector<32x32xf32>
    %c0_60 = arith.constant 0 : index
    %c0_61 = arith.constant 0 : index
    %85 = vector.load %arg10[%c0_60, %c0_61] : memref<8x32xf32, #tpu.memory_space<vmem>>, vector<8x32xf32>
    %cst = arith.constant dense<0.000000e+00> : vector<8x32xf32>
    %86 = tpu.matmul %85, %83, %cst {dimension_numbers = #tpu.dot_dimension_numbers<[1], [0], [0], [1], [0, 0, 1, 1], [], []>} : vector<8x32xf32>, vector<32x32xf32>, vector<8x32xf32> -> vector<8x32xf32>
    %c0_62 = arith.constant 0 : index
    %c0_63 = arith.constant 0 : index
    %87 = vector.load %arg11[%c0_62, %c0_63] : memref<8x32xf32, #tpu.memory_space<vmem>>, vector<8x32xf32>
    %cst_64 = arith.constant dense<0.000000e+00> : vector<8x32xf32>
    %88 = tpu.matmul %87, %84, %cst_64 {dimension_numbers = #tpu.dot_dimension_numbers<[1], [0], [0], [1], [0, 0, 1, 1], [], []>} : vector<8x32xf32>, vector<32x32xf32>, vector<8x32xf32> -> vector<8x32xf32>
    %89 = arith.addf %86, %88 : vector<8x32xf32>
    %c0_65 = arith.constant 0 : index
    %c0_66 = arith.constant 0 : index
    %90 = vector.load %arg5[%c0_65, %c0_66] : memref<1x32xf32, #tpu.memory_space<vmem>>, vector<1x32xf32>
    %91 = vector.broadcast %90 : vector<1x32xf32> to vector<8x32xf32>
    %92 = arith.addf %89, %91 : vector<8x32xf32>
    %93 = math.tanh %92 : vector<8x32xf32>
    %c8_i32 = arith.constant 8 : i32
    %94 = arith.muli %arg0, %c8_i32 : i32
    %c8_i32_67 = arith.constant 8 : i32
    %95 = arith.addi %c8_i32_67, %94 : i32
    %96 = tpu.assume_multiple %95, 8 : i32
    %97 = arith.index_cast %96 : i32 to index
    %c0_68 = arith.constant 0 : index
    %98 = vector.load %arg8[%97, %c0_68] : memref<32x32xf32, #tpu.memory_space<vmem>>, vector<8x32xf32>
    tpu.vector_store %arg8[%97, %c0_68], %93 {strides = array<i32>} : memref<32x32xf32, #tpu.memory_space<vmem>>, vector<8x32xf32>,
    %c0_69 = arith.constant 0 : index
    %c0_70 = arith.constant 0 : index
    %99 = vector.load %arg6[%c0_69, %c0_70] : memref<32x128xf32, #tpu.memory_space<vmem>>, vector<32x128xf32>
    %cst_71 = arith.constant dense<0.000000e+00> : vector<8x128xf32>
    %100 = tpu.matmul %93, %99, %cst_71 {dimension_numbers = #tpu.dot_dimension_numbers<[1], [0], [0], [1], [0, 0, 1, 1], [], []>} : vector<8x32xf32>, vector<32x128xf32>, vector<8x128xf32> -> vector<8x128xf32>
    %c0_72 = arith.constant 0 : index
    %c0_73 = arith.constant 0 : index
    %101 = vector.load %arg7[%c0_72, %c0_73] : memref<1x128xf32, #tpu.memory_space<vmem>>, vector<1x128xf32>
    %102 = vector.broadcast %101 : vector<1x128xf32> to vector<8x128xf32>
    %103 = arith.addf %100, %102 : vector<8x128xf32>
    %c0_74 = arith.constant 0 : index
    %c0_75 = arith.constant 0 : index
    %104 = vector.load %arg9[%c0_74, %c0_75] : memref<8x128xf32, #tpu.memory_space<vmem>>, vector<8x128xf32>
    tpu.vector_store %arg9[%c0_74, %c0_75], %103 {strides = array<i32>} : memref<8x128xf32, #tpu.memory_space<vmem>>, vector<8x128xf32>,
    return
  }
  func.func @transform_0(%arg0: i32, %arg1: memref<3x8xi32, #tpu.memory_space<smem>>, %arg2: memref<3x8xi32, #tpu.memory_space<smem>>) -> (i32, i32) {
    %c0_i32 = arith.constant 0 : i32
    %c0_i32_0 = arith.constant 0 : i32
    %c0_i32_1 = arith.constant 0 : i32
    return %c0_i32, %c0_i32_0 : i32, i32
  }
  func.func @transform_1(%arg0: i32, %arg1: memref<3x8xi32, #tpu.memory_space<smem>>, %arg2: memref<3x8xi32, #tpu.memory_space<smem>>) -> (i32, i32) {
    %c0_i32 = arith.constant 0 : i32
    %c0_i32_0 = arith.constant 0 : i32
    %c0_i32_1 = arith.constant 0 : i32
    return %c0_i32, %c0_i32_0 : i32, i32
  }
  func.func @transform_2(%arg0: i32, %arg1: memref<3x8xi32, #tpu.memory_space<smem>>, %arg2: memref<3x8xi32, #tpu.memory_space<smem>>) -> (i32, i32) {
    %c0_i32 = arith.constant 0 : i32
    %c0_i32_0 = arith.constant 0 : i32
    %c0_i32_1 = arith.constant 0 : i32
    return %c0_i32, %c0_i32_0 : i32, i32
  }
  func.func @transform_3(%arg0: i32, %arg1: memref<3x8xi32, #tpu.memory_space<smem>>, %arg2: memref<3x8xi32, #tpu.memory_space<smem>>) -> (i32, i32) {
    %c0_i32 = arith.constant 0 : i32
    %c0_i32_0 = arith.constant 0 : i32
    %c0_i32_1 = arith.constant 0 : i32
    return %c0_i32, %c0_i32_0 : i32, i32
  }
  func.func @transform_4(%arg0: i32, %arg1: memref<3x8xi32, #tpu.memory_space<smem>>, %arg2: memref<3x8xi32, #tpu.memory_space<smem>>) -> (i32, i32) {
    %c0_i32 = arith.constant 0 : i32
    %c0_i32_0 = arith.constant 0 : i32
    %c0_i32_1 = arith.constant 0 : i32
    return %c0_i32, %c0_i32_0 : i32, i32
  }
  func.func @transform_5(%arg0: i32, %arg1: memref<3x8xi32, #tpu.memory_space<smem>>, %arg2: memref<3x8xi32, #tpu.memory_space<smem>>) -> (i32, i32) {
    %c0_i32 = arith.constant 0 : i32
    %c0_i32_0 = arith.constant 0 : i32
    %c0_i32_1 = arith.constant 0 : i32
    return %c0_i32, %c0_i32_0 : i32, i32
  }
  func.func @transform_6(%arg0: i32, %arg1: memref<3x8xi32, #tpu.memory_space<smem>>, %arg2: memref<3x8xi32, #tpu.memory_space<smem>>) -> (i32, i32) {
    %c0_i32 = arith.constant 0 : i32
    %c0_i32_0 = arith.constant 0 : i32
    return %arg0, %c0_i32 : i32, i32
  }
}

</mosaic_0001>

<llo_original>
// kernel: forward.1
$region0: #{forward.1}
  #allocation0 [shape = 'u32[]', space=smem, size = 0x4, offset = 0x4, fixed_abs, tag = 'smem constant byte address 0x4 - core index']
  #allocation1 [shape = 'u32[144,128]{1,0:T(1,128)}', space=vmem, size = 0x12000, scoped, tag = 'internal scratch']
  #allocation2 [shape = 'f32[8,32]{1,0:T(8,128)}', space=vmem, size = 0x1000, scoped, tag = 'scratch operand']
  #allocation3 [shape = 'f32[8,32]{1,0:T(8,128)}', space=vmem, size = 0x1000, scoped, tag = 'scratch operand']
  #allocation4 [shape = 's32[1]{0}', space=sflag, size = 0x4, scoped, tag = 'scoped memory for forward.1']
  #allocation5 [shape = 'u8[2048]{0}', space=smem, size = 0x800, scoped, tag = 'prefetched SMEM operand 0']
  #allocation6 [shape = 'u8[2048]{0}', space=smem, size = 0x800, scoped, tag = 'prefetched SMEM operand 1']
  %s0 = inlined_call_operand.vmem [shape: s32[3,8], index: 0, kind: input, shape index: {}]
  %s1 = inlined_call_operand.vmem [shape: s32[3,8], index: 1, kind: input, shape index: {}]
  %s2 = inlined_call_operand.vmem [shape: f32[32,32], index: 2, kind: input, shape index: {}]
  %s3 = inlined_call_operand.vmem [shape: f32[64,32], index: 3, kind: input, shape index: {}]
  %s4 = inlined_call_operand.vmem [shape: f32[1,32], index: 4, kind: input, shape index: {}]
  %s5 = inlined_call_operand.vmem [shape: f32[32,128], index: 5, kind: input, shape index: {}]
  %s6 = inlined_call_operand.vmem [shape: f32[1,128], index: 6, kind: input, shape index: {}]
  %s7 = inlined_call_operand.hbm [shape: f32[32,32], index: 7, kind: output, shape index: {0}]
  %s8 = inlined_call_operand.vmem [shape: f32[24,128], index: 8, kind: output, shape index: {1}]
  %9 = xla_tuple %s7, %s8
  %s10 = sld [smem:[#allocation0]]
  $region65: #{forward.1} parent=0
    _
  %s12 = ssub.s32 1, %s10
  %s13 = scalar_select 0, %s12, %s10
  %s14 = sshll.u32 %s0, 4
  %s15 = int_to_ptr.vmem [resolvable:$true] %s14
  %17 = dma.vmem_to_smem %s15, 64, [#allocation5], [#allocation4]
  %s18 = sshll.u32 %s1, 4
  %s19 = int_to_ptr.vmem [resolvable:$true] %s18
  %21 = dma.vmem_to_smem %s19, 64, [#allocation6], [#allocation4]
  %22 = dma.done [#allocation4], 128
  %23 = sfence
  $region1: #{forward.1} parent=0
    #allocation7 [shape = 'u8[16384]{0}', space=vmem, size = 0x4000, scoped, tag = 'output window, operand 0, single buffered']
    #allocation8 [shape = 's32[2]{0}', space=sflag, size = 0x8, scoped, tag = 'scoped memory for forward.1']
    %24 = vsyncpa [#allocation8], 0
    loop: start=0, step=1, limit=5
    $region2: #{forward.1} parent=1 // loop_pre_header
      _
    $region3: #{forward.1} parent=1 // loop_header
      %s26 = sphi 0, %s30
      %p27 = scmp.ge.s32.totalorder %s26, 5
      %s34 = sphi 0, %s34
      %s36 = sphi 0, %s34
      %s37 = sphi 0, %s36
      %s51 = sphi 0, %s37
      %s55 = sphi 0, %s55
      %s57 = sphi 0, %s55
      %s58 = sphi 0, %s57
      %s72 = sphi 0, %s58
      %s76 = sphi 0, %s76
      %s78 = sphi 0, %s76
      %s79 = sphi 0, %s78
      %s93 = sphi 0, %s79
      %s97 = sphi 0, %s97
      %s99 = sphi 0, %s97
      %s100 = sphi 0, %s99
      %s114 = sphi 0, %s100
      %s118 = sphi 0, %s118
      %s120 = sphi 0, %s118
      %s121 = sphi 0, %s120
      %s135 = sphi 0, %s121
      %s139 = sphi 0, %s139
      %s141 = sphi 0, %s139
      %s142 = sphi 0, %s141
      %s156 = sphi 0, %s142
      %s162 = sphi 0, %s164
      %s165 = sphi 0, %s162
      %s166 = sphi 0, %s165
      %s182 = sphi 0, %s166
    $region4: #{forward.1} parent=1 // loop_header_branch
      %29 = sbr.rel (%p27) target = $region8
    $region5: #{forward.1} parent=1 // loop_body
      %s31 = ssub.s32 %s26, 1
      %s32 = ssub.s32 %s26, 2
      %s33 = sadd.s32 %s26, 1
      %s35 = sadd.s32 %s34, 1
      %p38 = scmp.eq.s32.totalorder %s26, 2
      %p39 = scmp.ne.s32.totalorder %s34, %s36
      %p40 = scmp.eq.s32.totalorder %s26, 0
      %p41 = por %p39, %p40
      %p42 = scmp.ne.s32.totalorder %s34, %s36
      %p43 = scmp.eq.s32.totalorder %s31, 2
      %p44 = por %p42, %p43
      %p45 = scmp.ne.s32.totalorder %s36, %s37
      %p46 = scmp.eq.s32.totalorder %s31, 0
      %p47 = por %p45, %p46
      %p48 = scmp.ne.s32.totalorder %s36, %s37
      %p49 = scmp.eq.s32.totalorder %s32, 2
      %p50 = por %p48, %p49
      %p52 = scmp.ne.s32.totalorder %s37, %s51
      %p53 = scmp.eq.s32.totalorder %s32, 0
      %p54 = por %p52, %p53
      %s56 = sadd.s32 %s55, 1
      %p59 = scmp.eq.s32.totalorder %s26, 2
      %p60 = scmp.ne.s32.totalorder %s55, %s57
      %p61 = scmp.eq.s32.totalorder %s26, 0
      %p62 = por %p60, %p61
      %p63 = scmp.ne.s32.totalorder %s55, %s57
      %p64 = scmp.eq.s32.totalorder %s31, 2
      %p65 = por %p63, %p64
      %p66 = scmp.ne.s32.totalorder %s57, %s58
      %p67 = scmp.eq.s32.totalorder %s31, 0
      %p68 = por %p66, %p67
      %p69 = scmp.ne.s32.totalorder %s57, %s58
      %p70 = scmp.eq.s32.totalorder %s32, 2
      %p71 = por %p69, %p70
      %p73 = scmp.ne.s32.totalorder %s58, %s72
      %p74 = scmp.eq.s32.totalorder %s32, 0
      %p75 = por %p73, %p74
      %s77 = sadd.s32 %s76, 1
      %p80 = scmp.eq.s32.totalorder %s26, 2
      %p81 = scmp.ne.s32.totalorder %s76, %s78
      %p82 = scmp.eq.s32.totalorder %s26, 0
      %p83 = por %p81, %p82
      %p84 = scmp.ne.s32.totalorder %s76, %s78
      %p85 = scmp.eq.s32.totalorder %s31, 2
      %p86 = por %p84, %p85
      %p87 = scmp.ne.s32.totalorder %s78, %s79
      %p88 = scmp.eq.s32.totalorder %s31, 0
      %p89 = por %p87, %p88
      %p90 = scmp.ne.s32.totalorder %s78, %s79
      %p91 = scmp.eq.s32.totalorder %s32, 2
      %p92 = por %p90, %p91
      %p94 = scmp.ne.s32.totalorder %s79, %s93
      %p95 = scmp.eq.s32.totalorder %s32, 0
      %p96 = por %p94, %p95
      %s98 = sadd.s32 %s97, 1
      %p101 = scmp.eq.s32.totalorder %s26, 2
      %p102 = scmp.ne.s32.totalorder %s97, %s99
      %p103 = scmp.eq.s32.totalorder %s26, 0
      %p104 = por %p102, %p103
      %p105 = scmp.ne.s32.totalorder %s97, %s99
      %p106 = scmp.eq.s32.totalorder %s31, 2
      %p107 = por %p105, %p106
      %p108 = scmp.ne.s32.totalorder %s99, %s100
      %p109 = scmp.eq.s32.totalorder %s31, 0
      %p110 = por %p108, %p109
      %p111 = scmp.ne.s32.totalorder %s99, %s100
      %p112 = scmp.eq.s32.totalorder %s32, 2
      %p113 = por %p111, %p112
      %p115 = scmp.ne.s32.totalorder %s100, %s114
      %p116 = scmp.eq.s32.totalorder %s32, 0
      %p117 = por %p115, %p116
      %s119 = sadd.s32 %s118, 1
      %p122 = scmp.eq.s32.totalorder %s26, 2
      %p123 = scmp.ne.s32.totalorder %s118, %s120
      %p124 = scmp.eq.s32.totalorder %s26, 0
      %p125 = por %p123, %p124
      %p126 = scmp.ne.s32.totalorder %s118, %s120
      %p127 = scmp.eq.s32.totalorder %s31, 2
      %p128 = por %p126, %p127
      %p129 = scmp.ne.s32.totalorder %s120, %s121
      %p130 = scmp.eq.s32.totalorder %s31, 0
      %p131 = por %p129, %p130
      %p132 = scmp.ne.s32.totalorder %s120, %s121
      %p133 = scmp.eq.s32.totalorder %s32, 2
      %p134 = por %p132, %p133
      %p136 = scmp.ne.s32.totalorder %s121, %s135
      %p137 = scmp.eq.s32.totalorder %s32, 0
      %p138 = por %p136, %p137
      %s140 = sadd.s32 %s139, 1
      %p143 = scmp.eq.s32.totalorder %s26, 2
      %p144 = scmp.ne.s32.totalorder %s139, %s141
      %p145 = scmp.eq.s32.totalorder %s26, 0
      %p146 = por %p144, %p145
      %p147 = scmp.ne.s32.totalorder %s139, %s141
      %p148 = scmp.eq.s32.totalorder %s31, 2
      %p149 = por %p147, %p148
      %p150 = scmp.ne.s32.totalorder %s141, %s142
      %p151 = scmp.eq.s32.totalorder %s31, 0
      %p152 = por %p150, %p151
      %p153 = scmp.ne.s32.totalorder %s141, %s142
      %p154 = scmp.eq.s32.totalorder %s32, 2
      %p155 = por %p153, %p154
      %p157 = scmp.ne.s32.totalorder %s142, %s156
      %p158 = scmp.eq.s32.totalorder %s32, 0
      %p159 = por %p157, %p158
      %s160 = ssub.s32 %s26, %s33
      %p161 = scmp.eq.s32.totalorder %s160, 0
      %s163 = sadd.s32 %s162, 1
      %s164 = scalar_select %p161, %s162, %s163
      %p167 = pneg %p161
      %p168 = scmp.eq.s32.totalorder %s26, 2
      %p169 = por %p167, %p168
      %p170 = scmp.ne.s32.totalorder %s162, %s165
      %p171 = scmp.eq.s32.totalorder %s26, 0
      %p172 = por %p170, %p171
      %p173 = scmp.ne.s32.totalorder %s162, %s165
      %p174 = scmp.eq.s32.totalorder %s31, 2
      %p175 = por %p173, %p174
      %p176 = scmp.ne.s32.totalorder %s165, %s166
      %p177 = scmp.eq.s32.totalorder %s31, 0
      %p178 = por %p176, %p177
      %p179 = scmp.ne.s32.totalorder %s165, %s166
      %p180 = scmp.eq.s32.totalorder %s32, 2
      %p181 = por %p179, %p180
      %p183 = scmp.ne.s32.totalorder %s166, %s182
      %p184 = scmp.eq.s32.totalorder %s32, 0
      %p185 = por %p183, %p184
      %p186 = scmp.le.s32.totalorder 1, %s26
      %p187 = scmp.lt.s32.totalorder %s26, 4
      %p188 = pnand %p186, %p187
      %p189 = pneg %p188
      // Predicated region
      $region9: #{forward.1} parent=5 // pred_check
        _
      $region10: #{forward.1} parent=5 // pred_check_branch
        %191 = sbr.rel (%p188) target = $region12
      $region11: #{forward.1} parent=5 // pred_region
        %s192 = ssub.s32 %s26, 1
        // Predicated region
        $region13: #{forward.1} parent=11 // pred_check
          %p193 = pneg %p47
        $region14: #{forward.1} parent=11 // pred_check_branch
          %195 = sbr.rel (%p193) target = $region16
        $region15: #{forward.1} parent=11 // pred_region
          _
        $region16: #{forward.1} parent=11 // pred_fallthru
          _
        // Predicated region
        $region17: #{forward.1} parent=11 // pred_check
          %p196 = pneg %p68
        $region18: #{forward.1} parent=11 // pred_check_branch
          %198 = sbr.rel (%p196) target = $region20
        $region19: #{forward.1} parent=11 // pred_region
          _
        $region20: #{forward.1} parent=11 // pred_fallthru
          _
        // Predicated region
        $region21: #{forward.1} parent=11 // pred_check
          %p199 = pneg %p89
        $region22: #{forward.1} parent=11 // pred_check_branch
          %201 = sbr.rel (%p199) target = $region24
        $region23: #{forward.1} parent=11 // pred_region
          _
        $region24: #{forward.1} parent=11 // pred_fallthru
          _
        // Predicated region
        $region25: #{forward.1} parent=11 // pred_check
          %p202 = pneg %p110
        $region26: #{forward.1} parent=11 // pred_check_branch
          %204 = sbr.rel (%p202) target = $region28
        $region27: #{forward.1} parent=11 // pred_region
          _
        $region28: #{forward.1} parent=11 // pred_fallthru
          _
        // Predicated region
        $region29: #{forward.1} parent=11 // pred_check
          %p205 = pneg %p131
        $region30: #{forward.1} parent=11 // pred_check_branch
          %207 = sbr.rel (%p205) target = $region32
        $region31: #{forward.1} parent=11 // pred_region
          _
        $region32: #{forward.1} parent=11 // pred_fallthru
          _
      $region12: #{forward.1} parent=5 // pred_fallthru
        _
      %p208 = scmp.lt.s32.totalorder %s26, 3
      // Predicated region
      $region33: #{forward.1} parent=5 // pred_check
        %p209 = pneg %p208
      $region34: #{forward.1} parent=5 // pred_check_branch
        %211 = sbr.rel (%p209) target = $region36
      $region35: #{forward.1} parent=5 // pred_region
        _
      $region36: #{forward.1} parent=5 // pred_fallthru
        _
      %p212 = scmp.le.s32.totalorder 1, %s26
      %p213 = scmp.lt.s32.totalorder %s26, 4
      %p214 = pnand %p212, %p213
      %p215 = pneg %p214
      // Predicated region
      $region37: #{forward.1} parent=5 // pred_check
        _
      $region38: #{forward.1} parent=5 // pred_check_branch
        %217 = sbr.rel (%p214) target = $region40
      $region39: #{forward.1} parent=5 // pred_region
        %s218 = ssub.s32 %s26, 1
        %p219 = pneg %p47
        %p220 = pneg %p44
        %p221 = pneg %p68
        %p222 = pneg %p65
        %p223 = pneg %p89
        %p224 = pneg %p86
        %p225 = pneg %p110
        %p226 = pneg %p107
        %p227 = pneg %p131
        %p228 = pneg %p128
        %p229 = pneg %p152
        %p230 = pneg %p149
        %p231 = pneg %p178
        %p232 = pneg %p175
        %p233 = scmp.lt.s32.totalorder %s31, 2
        %s234 = scalar_select %p233, %s31, 2
        %s235 = smul.addr %s234, 8
        %s236 = scalar_lea.vmem %s8, %s235
        %p237 = scmp.lt.s32.totalorder %s31, 2
        %s238 = scalar_select %p237, %s31, 2
        %s239 = smul.addr %s238, 8
        %s240 = scalar_lea.vmem %s8, %s239
        %p241 = scmp.eq.s32.totalorder %s31, 0
        // Predicated region
        $region41: #{forward.1} parent=39 // pred_check
          %p242 = pneg %p241
        $region42: #{forward.1} parent=39 // pred_check_branch
          %244 = sbr.rel (%p242) target = $region44
        $region43: #{forward.1} parent=39 // pred_region
          %v245 = vld [vmem:[%s2] sm:$0xff]
          %v246 = vld [vmem:[%s2 + $0x8] sm:$0xff]
          %v247 = vld [vmem:[%s2 + $0x10] sm:$0xff]
          %v248 = vld [vmem:[%s2 + $0x18] sm:$0xff]
          %vm249 = vcmask 261120
          %250 = vst.msk [vmem:[#allocation7] sm:$0xff] %vm249, %v245
          %251 = vst.msk [vmem:[#allocation7 + $0x8] sm:$0xff] %vm249, %v246
          %252 = vst.msk [vmem:[#allocation7 + $0x10] sm:$0xff] %vm249, %v247
          %253 = vst.msk [vmem:[#allocation7 + $0x18] sm:$0xff] %vm249, %v248
        $region44: #{forward.1} parent=39 // pred_fallthru
          _
        %s254 = smul.u32 %s31, 128
        %s255 = sld [smem:[#allocation5 + %s254]]
        %s256 = scalar_lea.vmem [#allocation7], %s255
        %v257 = vld [vmem:[%s256] sm:$0x1]
        %vm258 = vcmask 253952
        %259 = vst.msk [vmem:[#allocation2] sm:$0x1] %vm258, %v257
        %s260 = sld [smem:[#allocation6 + %s254]]
        %s261 = scalar_lea.vmem [#allocation7], %s260
        %v262 = vld [vmem:[%s261] sm:$0x1]
        %263 = vst.msk [vmem:[#allocation3] sm:$0x1] %vm258, %v262
        %s264 = sadd.s32 %s254, 1
        %s265 = sld [smem:[#allocation5 + %s264]]
        %s266 = scalar_lea.vmem [#allocation7], %s265
        %v267 = vld [vmem:[%s266] sm:$0x1]
        %268 = vst.msk [vmem:[#allocation2 + $0x1] sm:$0x1] %vm258, %v267
        %s269 = sld [smem:[#allocation6 + %s264]]
        %s270 = scalar_lea.vmem [#allocation7], %s269
        %v271 = vld [vmem:[%s270] sm:$0x1]
        %272 = vst.msk [vmem:[#allocation3 + $0x1] sm:$0x1] %vm258, %v271
        %s273 = sadd.s32 %s254, 2
        %s274 = sld [smem:[#allocation5 + %s273]]
        %s275 = scalar_lea.vmem [#allocation7], %s274
        %v276 = vld [vmem:[%s275] sm:$0x1]
        %277 = vst.msk [vmem:[#allocation2 + $0x2] sm:$0x1] %vm258, %v276
        %s278 = sld [smem:[#allocation6 + %s273]]
        %s279 = scalar_lea.vmem [#allocation7], %s278
        %v280 = vld [vmem:[%s279] sm:$0x1]
        %281 = vst.msk [vmem:[#allocation3 + $0x2] sm:$0x1] %vm258, %v280
        %s282 = sadd.s32 %s254, 3
        %s283 = sld [smem:[#allocation5 + %s282]]
        %s284 = scalar_lea.vmem [#allocation7], %s283
        %v285 = vld [vmem:[%s284] sm:$0x1]
        %286 = vst.msk [vmem:[#allocation2 + $0x3] sm:$0x1] %vm258, %v285
        %s287 = sld [smem:[#allocation6 + %s282]]
        %s288 = scalar_lea.vmem [#allocation7], %s287
        %v289 = vld [vmem:[%s288] sm:$0x1]
        %290 = vst.msk [vmem:[#allocation3 + $0x3] sm:$0x1] %vm258, %v289
        %s291 = sadd.s32 %s254, 4
        %s292 = sld [smem:[#allocation5 + %s291]]
        %s293 = scalar_lea.vmem [#allocation7], %s292
        %v294 = vld [vmem:[%s293] sm:$0x1]
        %295 = vst.msk [vmem:[#allocation2 + $0x4] sm:$0x1] %vm258, %v294
        %s296 = sld [smem:[#allocation6 + %s291]]
        %s297 = scalar_lea.vmem [#allocation7], %s296
        %v298 = vld [vmem:[%s297] sm:$0x1]
        %299 = vst.msk [vmem:[#allocation3 + $0x4] sm:$0x1] %vm258, %v298
        %s300 = sadd.s32 %s254, 5
        %s301 = sld [smem:[#allocation5 + %s300]]
        %s302 = scalar_lea.vmem [#allocation7], %s301
        %v303 = vld [vmem:[%s302] sm:$0x1]
        %304 = vst.msk [vmem:[#allocation2 + $0x5] sm:$0x1] %vm258, %v303
        %s305 = sld [smem:[#allocation6 + %s300]]
        %s306 = scalar_lea.vmem [#allocation7], %s305
        %v307 = vld [vmem:[%s306] sm:$0x1]
        %308 = vst.msk [vmem:[#allocation3 + $0x5] sm:$0x1] %vm258, %v307
        %s309 = sadd.s32 %s254, 6
        %s310 = sld [smem:[#allocation5 + %s309]]
        %s311 = scalar_lea.vmem [#allocation7], %s310
        %v312 = vld [vmem:[%s311] sm:$0x1]
        %313 = vst.msk [vmem:[#allocation2 + $0x6] sm:$0x1] %vm258, %v312
        %s314 = sld [smem:[#allocation6 + %s309]]
        %s315 = scalar_lea.vmem [#allocation7], %s314
        %v316 = vld [vmem:[%s315] sm:$0x1]
        %317 = vst.msk [vmem:[#allocation3 + $0x6] sm:$0x1] %vm258, %v316
        %s318 = sadd.s32 %s254, 7
        %s319 = sld [smem:[#allocation5 + %s318]]
        %s320 = scalar_lea.vmem [#allocation7], %s319
        %v321 = vld [vmem:[%s320] sm:$0x1]
        %322 = vst.msk [vmem:[#allocation2 + $0x7] sm:$0x1] %vm258, %v321
        %s323 = sld [smem:[#allocation6 + %s318]]
        %s324 = scalar_lea.vmem [#allocation7], %s323
        %v325 = vld [vmem:[%s324] sm:$0x1]
        %326 = vst.msk [vmem:[#allocation3 + $0x7] sm:$0x1] %vm258, %v325
        %v327 = vld [vmem:[%s3] sm:$0xff]
        %v328 = vld [vmem:[%s3 + $0x8] sm:$0xff]
        %v329 = vld [vmem:[%s3 + $0x10] sm:$0xff]
        %v330 = vld [vmem:[%s3 + $0x18] sm:$0xff]
        %v331 = vld [vmem:[%s3 + $0x20] sm:$0xff]
        %v332 = vld [vmem:[%s3 + $0x28] sm:$0xff]
        %v333 = vld [vmem:[%s3 + $0x30] sm:$0xff]
        %v334 = vld [vmem:[%s3 + $0x38] sm:$0xff]
        %v335 = vld [vmem:[#allocation2] sm:$0xff]
        %v336 = vld [vmem:[#allocation3] sm:$0xff]
        %vm337 = vcmask 261120
        %v339 = vsel %vm337, %v336, 0
        %341 = vmatprep.subr.mxu0 0.0
        %342 = vmatpush1.msra.mxu0 %v331
        %343 = vmatprep.subr.mxu0 0.0
        %344 = vmatpush1.msra.mxu0 %v332
        %345 = vmatprep.subr.mxu0 0.0
        %346 = vmatpush1.msra.mxu0 %v333
        %347 = vmatprep.subr.mxu0 0.0
        %348 = vmatpush1.msra.mxu0 %v334
        %349 = vmatprep.subr.mxu0 0.0
        %350 = vmatpush1.msra.mxu0 0.0
        %351 = vmatprep.subr.mxu0 0.0
        %352 = vmatpush1.msra.mxu0 0.0
        %353 = vmatprep.subr.mxu0 0.0
        %354 = vmatpush1.msra.mxu0 0.0
        %355 = vmatprep.subr.mxu0 0.0
        %356 = vmatpush1.msra.mxu0 0.0
        %357 = vmatprep.subr.mxu0 0.0
        %358 = vmatpush1.msra.mxu0 0.0
        %359 = vmatprep.subr.mxu0 0.0
        %360 = vmatpush1.msra.mxu0 0.0
        %361 = vmatprep.subr.mxu0 0.0
        %362 = vmatpush1.msra.mxu0 0.0
        %363 = vmatprep.subr.mxu0 0.0
        %364 = vmatpush1.msra.mxu0 0.0
        %365 = vmatprep.subr.mxu0 0.0
        %366 = vmatpush1.msra.mxu0 0.0
        %367 = vmatprep.subr.mxu0 0.0
        %368 = vmatpush1.msra.mxu0 0.0
        %369 = vmatprep.subr.mxu0 0.0
        %370 = vmatpush1.msra.mxu0 0.0
        %371 = vmatprep.subr.mxu0 0.0
        %372 = vmatpush1.msra.mxu0 0.0
        %373 = vmatprep.subr.mxu0 0.0
        %374 = vmatpush1.msra.mxu0 0.0
        %375 = vmatprep.subr.mxu0 0.0
        %376 = vmatpush1.msra.mxu0 0.0
        %377 = vmatprep.subr.mxu0 0.0
        %378 = vmatpush1.msra.mxu0 0.0
        %379 = vmatprep.subr.mxu0 0.0
        %380 = vmatpush1.msra.mxu0 0.0
        %381 = vmatprep.subr.mxu0 0.0
        %382 = vmatpush1.msra.mxu0 0.0
        %383 = vmatprep.subr.mxu0 0.0
        %384 = vmatpush1.msra.mxu0 0.0
        %385 = vmatprep.subr.mxu0 0.0
        %386 = vmatpush1.msra.mxu0 0.0
        %387 = vmatprep.subr.mxu0 0.0
        %388 = vmatpush1.msra.mxu0 0.0
        %389 = vmatprep.subr.mxu0 0.0
        %390 = vmatpush1.msra.mxu0 0.0
        %391 = vmatprep.subr.mxu0 0.0
        %392 = vmatpush1.msra.mxu0 0.0
        %393 = vmatprep.subr.mxu0 0.0
        %394 = vmatpush1.msra.mxu0 0.0
        %395 = vmatprep.subr.mxu0 0.0
        %396 = vmatpush1.msra.mxu0 0.0
        %397 = vmatprep.subr.mxu0 0.0
        %398 = vmatpush1.msra.mxu0 0.0
        %399 = vmatprep.subr.mxu0 0.0
        %400 = vmatpush1.msra.mxu0 0.0
        %401 = vmatprep.subr.mxu0 0.0
        %402 = vmatpush1.msra.mxu0 0.0
        %403 = vmatprep.subr.mxu0 0.0
        %404 = vmatpush1.msra.mxu0 0.0
        %405 = vmatprep.mubr.f32.mxu0 0.0
        %406 = vmatmul.mubr.f32.gmra.mrb[0].mxu0 %v339
        %v407 = vpop.f32.mrb[0].mxu0
        %v408 = vadd.f32 0.0, %v407
        %v409 = vpop.f32.mrb[0].mxu0
        %410 = vdwg.mxu0
        %v412 = vsel %vm337, %v335, 0
        %414 = vmatprep.subr.mxu0 0.0
        %415 = vmatpush1.msra.mxu0 %v327
        %416 = vmatprep.subr.mxu0 0.0
        %417 = vmatpush1.msra.mxu0 %v328
        %418 = vmatprep.subr.mxu0 0.0
        %419 = vmatpush1.msra.mxu0 %v329
        %420 = vmatprep.subr.mxu0 0.0
        %421 = vmatpush1.msra.mxu0 %v330
        %422 = vmatprep.subr.mxu0 0.0
        %423 = vmatpush1.msra.mxu0 0.0
        %424 = vmatprep.subr.mxu0 0.0
        %425 = vmatpush1.msra.mxu0 0.0
        %426 = vmatprep.subr.mxu0 0.0
        %427 = vmatpush1.msra.mxu0 0.0
        %428 = vmatprep.subr.mxu0 0.0
        %429 = vmatpush1.msra.mxu0 0.0
        %430 = vmatprep.subr.mxu0 0.0
        %431 = vmatpush1.msra.mxu0 0.0
        %432 = vmatprep.subr.mxu0 0.0
        %433 = vmatpush1.msra.mxu0 0.0
        %434 = vmatprep.subr.mxu0 0.0
        %435 = vmatpush1.msra.mxu0 0.0
        %436 = vmatprep.subr.mxu0 0.0
        %437 = vmatpush1.msra.mxu0 0.0
        %438 = vmatprep.subr.mxu0 0.0
        %439 = vmatpush1.msra.mxu0 0.0
        %440 = vmatprep.subr.mxu0 0.0
        %441 = vmatpush1.msra.mxu0 0.0
        %442 = vmatprep.subr.mxu0 0.0
        %443 = vmatpush1.msra.mxu0 0.0
        %444 = vmatprep.subr.mxu0 0.0
        %445 = vmatpush1.msra.mxu0 0.0
        %446 = vmatprep.subr.mxu0 0.0
        %447 = vmatpush1.msra.mxu0 0.0
        %448 = vmatprep.subr.mxu0 0.0
        %449 = vmatpush1.msra.mxu0 0.0
        %450 = vmatprep.subr.mxu0 0.0
        %451 = vmatpush1.msra.mxu0 0.0
        %452 = vmatprep.subr.mxu0 0.0
        %453 = vmatpush1.msra.mxu0 0.0
        %454 = vmatprep.subr.mxu0 0.0
        %455 = vmatpush1.msra.mxu0 0.0
        %456 = vmatprep.subr.mxu0 0.0
        %457 = vmatpush1.msra.mxu0 0.0
        %458 = vmatprep.subr.mxu0 0.0
        %459 = vmatpush1.msra.mxu0 0.0
        %460 = vmatprep.subr.mxu0 0.0
        %461 = vmatpush1.msra.mxu0 0.0
        %462 = vmatprep.subr.mxu0 0.0
        %463 = vmatpush1.msra.mxu0 0.0
        %464 = vmatprep.subr.mxu0 0.0
        %465 = vmatpush1.msra.mxu0 0.0
        %466 = vmatprep.subr.mxu0 0.0
        %467 = vmatpush1.msra.mxu0 0.0
        %468 = vmatprep.subr.mxu0 0.0
        %469 = vmatpush1.msra.mxu0 0.0
        %470 = vmatprep.subr.mxu0 0.0
        %471 = vmatpush1.msra.mxu0 0.0
        %472 = vmatprep.subr.mxu0 0.0
        %473 = vmatpush1.msra.mxu0 0.0
        %474 = vmatprep.subr.mxu0 0.0
        %475 = vmatpush1.msra.mxu0 0.0
        %476 = vmatprep.subr.mxu0 0.0
        %477 = vmatpush1.msra.mxu0 0.0
        %478 = vmatprep.mubr.f32.mxu0 0.0
        %479 = vmatmul.mubr.f32.gmra.mrb[0].mxu0 %v412
        %v480 = vpop.f32.mrb[0].mxu0
        %v481 = vadd.f32 %v408, %v480
        %v482 = vpop.f32.mrb[0].mxu0
        %483 = vdwg.mxu0
        %v484 = vld [vmem:[%s4] sm:$0x1]
        %v486 = vlaneseq
        %v487 = vshrl.u32 %v486, 7
        %v488 = vsub.s32 0, %v487
        %v489 = vrot.slane %v484, %v488
        %v491 = vadd.f32 %v481, %v489
        %v492 = vtanh.pop %v491
        %s493 = smul.u32 %s31, 8
        %s494 = sadd.s32 %s493, 8
        %s495 = scalar_lea.vmem [#allocation7], %s494
        %496 = vst.msk [vmem:[%s495] sm:$0xff] %vm337, %v492
        %v497 = vld [vmem:[%s5] sm:$0xff]
        %v498 = vld [vmem:[%s5 + $0x8] sm:$0xff]
        %v499 = vld [vmem:[%s5 + $0x10] sm:$0xff]
        %v500 = vld [vmem:[%s5 + $0x18] sm:$0xff]
        %v501 = vld [vmem:[%s6] sm:$0x1]
        %v503 = vlaneseq
        %v504 = vshrl.u32 %v503, 7
        %v505 = vsub.s32 0, %v504
        %v506 = vrot.slane %v501, %v505
        %v509 = vsel %vm337, %v492, 0
        %511 = vmatprep.subr.mxu0 0.0
        %512 = vmatpush1.msra.mxu0 %v497
        %513 = vmatprep.subr.mxu0 0.0
        %514 = vmatpush1.msra.mxu0 %v498
        %515 = vmatprep.subr.mxu0 0.0
        %516 = vmatpush1.msra.mxu0 %v499
        %517 = vmatprep.subr.mxu0 0.0
        %518 = vmatpush1.msra.mxu0 %v500
        %519 = vmatprep.subr.mxu0 0.0
        %520 = vmatpush1.msra.mxu0 0.0
        %521 = vmatprep.subr.mxu0 0.0
        %522 = vmatpush1.msra.mxu0 0.0
        %523 = vmatprep.subr.mxu0 0.0
        %524 = vmatpush1.msra.mxu0 0.0
        %525 = vmatprep.subr.mxu0 0.0
        %526 = vmatpush1.msra.mxu0 0.0
        %527 = vmatprep.subr.mxu0 0.0
        %528 = vmatpush1.msra.mxu0 0.0
        %529 = vmatprep.subr.mxu0 0.0
        %530 = vmatpush1.msra.mxu0 0.0
        %531 = vmatprep.subr.mxu0 0.0
        %532 = vmatpush1.msra.mxu0 0.0
        %533 = vmatprep.subr.mxu0 0.0
        %534 = vmatpush1.msra.mxu0 0.0
        %535 = vmatprep.subr.mxu0 0.0
        %536 = vmatpush1.msra.mxu0 0.0
        %537 = vmatprep.subr.mxu0 0.0
        %538 = vmatpush1.msra.mxu0 0.0
        %539 = vmatprep.subr.mxu0 0.0
        %540 = vmatpush1.msra.mxu0 0.0
        %541 = vmatprep.subr.mxu0 0.0
        %542 = vmatpush1.msra.mxu0 0.0
        %543 = vmatprep.subr.mxu0 0.0
        %544 = vmatpush1.msra.mxu0 0.0
        %545 = vmatprep.subr.mxu0 0.0
        %546 = vmatpush1.msra.mxu0 0.0
        %547 = vmatprep.subr.mxu0 0.0
        %548 = vmatpush1.msra.mxu0 0.0
        %549 = vmatprep.subr.mxu0 0.0
        %550 = vmatpush1.msra.mxu0 0.0
        %551 = vmatprep.subr.mxu0 0.0
        %552 = vmatpush1.msra.mxu0 0.0
        %553 = vmatprep.subr.mxu0 0.0
        %554 = vmatpush1.msra.mxu0 0.0
        %555 = vmatprep.subr.mxu0 0.0
        %556 = vmatpush1.msra.mxu0 0.0
        %557 = vmatprep.subr.mxu0 0.0
        %558 = vmatpush1.msra.mxu0 0.0
        %559 = vmatprep.subr.mxu0 0.0
        %560 = vmatpush1.msra.mxu0 0.0
        %561 = vmatprep.subr.mxu0 0.0
        %562 = vmatpush1.msra.mxu0 0.0
        %563 = vmatprep.subr.mxu0 0.0
        %564 = vmatpush1.msra.mxu0 0.0
        %565 = vmatprep.subr.mxu0 0.0
        %566 = vmatpush1.msra.mxu0 0.0
        %567 = vmatprep.subr.mxu0 0.0
        %568 = vmatpush1.msra.mxu0 0.0
        %569 = vmatprep.subr.mxu0 0.0
        %570 = vmatpush1.msra.mxu0 0.0
        %571 = vmatprep.subr.mxu0 0.0
        %572 = vmatpush1.msra.mxu0 0.0
        %573 = vmatprep.subr.mxu0 0.0
        %574 = vmatpush1.msra.mxu0 0.0
        %575 = vmatprep.mubr.f32.mxu0 0.0
        %576 = vmatmul.mubr.f32.gmra.mrb[0].mxu0 %v509
        %v577 = vpop.f32.mrb[0].mxu0
        %v578 = vadd.f32 %v506, %v577
        %v579 = vpop.f32.mrb[0].mxu0
        %580 = vdwg.mxu0
        %581 = vst [vmem:[%s240] sm:$0xff] %v578
        %p582 = scmp.lt.s32.totalorder %s31, 2
        %s583 = scalar_select %p582, %s31, 2
        %s584 = smul.addr %s583, 8
        %s585 = scalar_lea.vmem %s8, %s584
        // Predicated region
        $region45: #{forward.1} parent=39 // pred_check
          %p586 = pneg %p149
        $region46: #{forward.1} parent=39 // pred_check_branch
          %588 = sbr.rel (%p586) target = $region48
        $region47: #{forward.1} parent=39 // pred_region
          %s590 = ssub.s32 512, 512
          %591 = vsyncadd [#allocation8], %s590
          %s592 = sshll.u32 [#allocation7], 4
          %s593 = int_to_ptr.vmem [resolvable:$true] %s592
          %598 = dma.vmem_to_hbm [thread:$0]  %s593, 512, %s7, [#allocation8], 128, 128, 8
        $region48: #{forward.1} parent=39 // pred_fallthru
          _
        // Predicated region
        $region49: #{forward.1} parent=39 // pred_check
          %p599 = pneg %p175
        $region50: #{forward.1} parent=39 // pred_check_branch
          %601 = sbr.rel (%p599) target = $region52
        $region51: #{forward.1} parent=39 // pred_region
          _
        $region52: #{forward.1} parent=39 // pred_fallthru
          _
        // Predicated region
        $region53: #{forward.1} parent=39 // pred_check
          %p602 = pneg %p149
        $region54: #{forward.1} parent=39 // pred_check_branch
          %604 = sbr.rel (%p602) target = $region56
        $region55: #{forward.1} parent=39 // pred_region
          %605 = dma.done [#allocation8], 512
        $region56: #{forward.1} parent=39 // pred_fallthru
          _
      $region40: #{forward.1} parent=5 // pred_fallthru
        _
      %p606 = scmp.le.s32.totalorder 2, %s26
      // Predicated region
      $region57: #{forward.1} parent=5 // pred_check
        %p607 = pneg %p606
      $region58: #{forward.1} parent=5 // pred_check_branch
        %609 = sbr.rel (%p607) target = $region60
      $region59: #{forward.1} parent=5 // pred_region
        %s610 = ssub.s32 %s26, 2
        // Predicated region
        $region61: #{forward.1} parent=59 // pred_check
          %p611 = pneg %p181
        $region62: #{forward.1} parent=59 // pred_check_branch
          %613 = sbr.rel (%p611) target = $region64
        $region63: #{forward.1} parent=59 // pred_region
          %p614 = scmp.lt.s32.totalorder %s32, 2
          %s615 = scalar_select %p614, %s32, 2
          %s616 = smul.addr %s615, 8
          %s617 = scalar_lea.vmem %s8, %s616
        $region64: #{forward.1} parent=59 // pred_fallthru
          _
      $region60: #{forward.1} parent=5 // pred_fallthru
        _
    $region6: #{forward.1} parent=1 // loop_footer
      %s30 = sadd.s32 1, %s26
    $region7: #{forward.1} parent=1 // loop_footer_branch
      %25 = sbr.rel target = $region3
    $region8: #{forward.1} parent=1 // loop_exit
      _
    %618 = vsyncpa [#allocation8], 1
    %s619 = scalar_lea.sflag [#allocation8], 1
    %620 = vsyncpa %s619, 1

</llo_original>
